<compile_context>
chip_gen: v7x
topology: tpu7x:2x2x1
jax: 0.10.0
libtpu: 0.0.40
codegen_flags: <defaults>
</compile_context>

<pallas_src>
import math

import jax
import jax.numpy as jnp
from jax.experimental import pallas as pl
from jax.experimental.pallas import tpu as pltpu


def _round_up(v, m):
    return (v + m - 1) // m * m


def _make_kernel(starts, tile_l, load_w, has_bias):
    """Build the Pallas kernel body.

    starts : static per-tap column offsets into the shared padded input slab
    tile_l : output tile width along L (multiple of 128)
    load_w : width of the 128-aligned input window loaded per tile
    """

    def kernel(*refs):
        if has_bias:
            w_ref, b_ref, x_ref, o_ref = refs
        else:
            w_ref, x_ref, o_ref = refs

        t = pl.program_id(1)
        l0 = pl.multiple_of(t * tile_l, 128)
        # One aligned dynamic load of (C, tile_l + halo); the K shifted views
        # are cheap static lane slices of this value (XLU work, hidden under
        # the MXU matmuls).
        xw = x_ref[0, :, pl.ds(l0, load_w)]

        acc = None
        for n, s in enumerate(starts):          # K is small; unrolled at trace time
            xs = xw[:, s:s + tile_l]            # (C, tile_l)
            part = jnp.dot(w_ref[n], xs, preferred_element_type=jnp.float32)
            acc = part if acc is None else acc + part

        if has_bias:
            acc = acc + b_ref[...]              # (O_pad, 1) broadcast over lanes
        o_ref[0] = acc.astype(o_ref.dtype)

    return kernel


def conv1d_fix(x, weight, bias, padding, *, tile_l=512):
    """Faithful reimplementation of Conv1dFix.forward (pad/roll/cat/view/matmul).

    x      : (B, C_in, L)
    weight : (O, C_in, K)
    bias   : (O,) or None
    returns: (B, O, L)
    """
    B, C, L = x.shape
    O, Cw, K = weight.shape
    assert Cw == C, "weight / in_channels mismatch"
    p = int(padding)

    # ---- index arithmetic of the reference pad/roll/cat/slice, w/o the K x blowup.
    # xcat[b, n*C + c, l] == xpad[b, c, (l + 2p - n) mod (L + 2p)]
    xpad = jnp.pad(x, ((0, 0), (0, 0), (p, p)))             # (B, C, L + 2p)
    extra = max(0, K - 1 - 2 * p)                           # roll wrap-around columns
    if extra > 0:
        x_src = jnp.concatenate([xpad[:, :, xpad.shape[2] - extra:], xpad], axis=2)
    else:
        x_src = xpad
    starts = [2 * p - n + extra for n in range(K)]          # per-tap offsets into x_src
    base = min(starts)
    starts = tuple(s - base for s in starts)
    if base > 0:
        x_src = x_src[:, :, base:]
    halo = max(starts)                                      # <= K - 1

    # ---- lane/sublane-friendly padding & tiling.
    TL = _round_up(min(max(int(tile_l), 128), _round_up(L, 128)), 128)
    L_pad = _round_up(L, TL)
    O_pad = _round_up(O, 8)
    halo_pad = _round_up(halo, 128) if halo > 0 else 0
    Lw = L_pad + halo_pad
    x_src = jnp.pad(x_src, ((0, 0), (0, 0), (0, Lw - x_src.shape[2])))

    # Per-shift weight blocks, exactly matching the spec's cat order + view:
    #   W_shift[n, o, c] == weight.view(O, C*K)[o, n*C + c]
    w_shift = weight.reshape(O, K, C).transpose(1, 0, 2)    # (K, O, C)
    w_shift = jnp.pad(w_shift, ((0, 0), (0, O_pad - O), (0, 0)))

    has_bias = bias is not None
    in_specs = [pl.BlockSpec((K, O_pad, C), lambda b, t: (0, 0, 0))]   # resident weight
    args = [w_shift]
    if has_bias:
        b_col = jnp.pad(bias.astype(x.dtype).reshape(O, 1), ((0, O_pad - O), (0, 0)))
        in_specs.append(pl.BlockSpec((O_pad, 1), lambda b, t: (0, 0)))
        args.append(b_col)
    # Whole padded time axis per batch; its block index only depends on b, so it
    # is DMA'd once per batch and reused across all L tiles.
    in_specs.append(pl.BlockSpec((1, C, Lw), lambda b, t: (b, 0, 0)))
    args.append(x_src)
    # TODO(synk): for extremely long sequences, switch the input to halo-overlapped
    # (TL + K - 1) tiles via manual DMA so the per-batch slab need not fit in VMEM.

    out_spec = pl.BlockSpec((1, O_pad, TL), lambda b, t: (b, 0, t))

    itemsize = jnp.dtype(x.dtype).itemsize
    cost = pl.CostEstimate(
        flops=2 * B * O_pad * C * K * L_pad,
        transcendentals=0,
        bytes_accessed=int(x_src.size * itemsize
                           + w_shift.size * jnp.dtype(weight.dtype).itemsize
                           + B * O_pad * L_pad * itemsize),
    )

    out = pl.pallas_call(
        _make_kernel(starts, TL, TL + halo_pad, has_bias),
        out_shape=jax.ShapeDtypeStruct((B, O_pad, L_pad), x.dtype),
        grid_spec=pltpu.PrefetchScalarGridSpec(
            num_scalar_prefetch=0,
            grid=(B, L_pad // TL),
            in_specs=in_specs,
            out_specs=out_spec,
        ),
        compiler_params=pltpu.CompilerParams(
            dimension_semantics=("parallel", "parallel"),
            vmem_limit_bytes=32 * 1024 * 1024,
        ),
        cost_estimate=cost,
    )(*args)
    return out[:, :O, :L]


def _reference(x, weight, bias, padding):
    """Pure-JAX transliteration of the PyTorch forward (for validation)."""
    B, C, L = x.shape
    O, _, K = weight.shape
    p = padding
    xp = jnp.pad(x, ((0, 0), (0, 0), (p, p)))
    xcat = jnp.concatenate([jnp.roll(xp, n - p, axis=2) for n in range(K)], axis=1)
    xcat = xcat[:, :, p:p + L]          # == p:-p for p > 0, and safe for p == 0
    out = jnp.matmul(weight.reshape(O, C * K), xcat)
    if bias is not None:
        out = out + bias[:, None]
    return out


if __name__ == "__main__":
    # Module config (small, consistent with Conv1dFix.__init__)
    in_channels, out_channels, kernel_size, padding = 4, 8, 5, 2
    B, L = 2, 16

    key = jax.random.PRNGKey(0)
    kx, kw, kb = jax.random.split(key, 3)

    # weight: xavier_uniform over (O, C_in, K); bias: standard normal
    fan_in = in_channels * kernel_size
    fan_out = out_channels * kernel_size
    bound = math.sqrt(6.0 / (fan_in + fan_out))
    weight = jax.random.uniform(
        kw, (out_channels, in_channels, kernel_size),
        minval=-bound, maxval=bound, dtype=jnp.float32)
    bias = jax.random.normal(kb, (out_channels,), dtype=jnp.float32)
    x = jax.random.normal(kx, (B, in_channels, L), dtype=jnp.float32)

    out = conv1d_fix(x, weight, bias, padding)
    out = jax.block_until_ready(out)
    ref = _reference(x, weight, bias, padding)
    assert out.shape == (B, out_channels, L)
    assert jnp.allclose(out, ref, atol=1e-4, rtol=1e-4), "mismatch vs reference"

    # Extra check: roll wrap-around case (kernel_size > 2*padding + 1), no bias,
    # out_channels not a multiple of 8.
    k2a, k2b = jax.random.split(jax.random.PRNGKey(1))
    w2 = jax.random.uniform(k2a, (5, 3, 5), minval=-0.3, maxval=0.3, dtype=jnp.float32)
    x2 = jax.random.normal(k2b, (1, 3, 10), dtype=jnp.float32)
    out2 = jax.block_until_ready(conv1d_fix(x2, w2, None, 1))
    ref2 = _reference(x2, w2, None, 1)
    assert out2.shape == ref2.shape
    assert jnp.allclose(out2, ref2, atol=1e-4, rtol=1e-4), "mismatch (wrap / no-bias)"

    print("KERNEL_OK")
</pallas_src>

<mosaic_0001>
module attributes {stable_mosaic.version = 11 : i64} {
  func.func @kernel(%arg0: i32, %arg1: i32, %arg2: memref<5x8x4xf32, #tpu.memory_space<vmem>>, %arg3: memref<8x1xf32, #tpu.memory_space<vmem>>, %arg4: memref<1x4x256xf32, #tpu.memory_space<vmem>>, %arg5: memref<1x8x128xf32, #tpu.memory_space<vmem>>) attributes {dimension_semantics = [#tpu.dimension_semantics<parallel>, #tpu.dimension_semantics<parallel>], iteration_bounds = array<i64: 2, 1>, scalar_prefetch = 0 : i64, scratch_operands = 0 : i64, tpu.core_type = #tpu.core_type<tc>, window_params = [{pipeline_mode = #tpu.pipeline_mode<synchronous>, transform_indices = @transform_0, window_bounds = array<i64: 5, 8, 4>}, {pipeline_mode = #tpu.pipeline_mode<synchronous>, transform_indices = @transform_1, window_bounds = array<i64: 8, 1>}, {transform_indices = @transform_2, window_bounds = array<i64: 1, 4, 256>}, {transform_indices = @transform_3, window_bounds = array<i64: 1, 8, 128>}]} {
    %c128_i32 = arith.constant 128 : i32
    %0 = arith.muli %arg1, %c128_i32 : i32
    %1 = tpu.assume_multiple %0, 128 : i32
    %c0 = arith.constant 0 : index
    %c0_0 = arith.constant 0 : index
    %2 = arith.index_cast %1 : i32 to index
    %3 = vector.load %arg4[%c0, %c0_0, %2] : memref<1x4x256xf32, #tpu.memory_space<vmem>>, vector<1x4x256xf32>
    %4 = vector.shape_cast %3 : vector<1x4x256xf32> to vector<4x256xf32>
    %5 = vector.extract_strided_slice %4 {offsets = [0, 4], sizes = [4, 128], strides = [1, 1]} : vector<4x256xf32> to vector<4x128xf32>
    %c0_1 = arith.constant 0 : index
    %c0_2 = arith.constant 0 : index
    %c0_3 = arith.constant 0 : index
    %6 = vector.load %arg2[%c0_1, %c0_2, %c0_3] : memref<5x8x4xf32, #tpu.memory_space<vmem>>, vector<1x8x4xf32>
    %7 = vector.shape_cast %6 : vector<1x8x4xf32> to vector<8x4xf32>
    %cst = arith.constant dense<0.000000e+00> : vector<8x128xf32>
    %8 = tpu.matmul %7, %5, %cst {dimension_numbers = #tpu.dot_dimension_numbers<[1], [0], [0], [1], [0, 0, 1, 1], [], []>} : vector<8x4xf32>, vector<4x128xf32>, vector<8x128xf32> -> vector<8x128xf32>
    %9 = vector.extract_strided_slice %4 {offsets = [0, 3], sizes = [4, 128], strides = [1, 1]} : vector<4x256xf32> to vector<4x128xf32>
    %c1 = arith.constant 1 : index
    %c0_4 = arith.constant 0 : index
    %c0_5 = arith.constant 0 : index
    %10 = vector.load %arg2[%c1, %c0_4, %c0_5] : memref<5x8x4xf32, #tpu.memory_space<vmem>>, vector<1x8x4xf32>
    %11 = vector.shape_cast %10 : vector<1x8x4xf32> to vector<8x4xf32>
    %cst_6 = arith.constant dense<0.000000e+00> : vector<8x128xf32>
    %12 = tpu.matmul %11, %9, %cst_6 {dimension_numbers = #tpu.dot_dimension_numbers<[1], [0], [0], [1], [0, 0, 1, 1], [], []>} : vector<8x4xf32>, vector<4x128xf32>, vector<8x128xf32> -> vector<8x128xf32>
    %13 = arith.addf %8, %12 : vector<8x128xf32>
    %14 = vector.extract_strided_slice %4 {offsets = [0, 2], sizes = [4, 128], strides = [1, 1]} : vector<4x256xf32> to vector<4x128xf32>
    %c2 = arith.constant 2 : index
    %c0_7 = arith.constant 0 : index
    %c0_8 = arith.constant 0 : index
    %15 = vector.load %arg2[%c2, %c0_7, %c0_8] : memref<5x8x4xf32, #tpu.memory_space<vmem>>, vector<1x8x4xf32>
    %16 = vector.shape_cast %15 : vector<1x8x4xf32> to vector<8x4xf32>
    %cst_9 = arith.constant dense<0.000000e+00> : vector<8x128xf32>
    %17 = tpu.matmul %16, %14, %cst_9 {dimension_numbers = #tpu.dot_dimension_numbers<[1], [0], [0], [1], [0, 0, 1, 1], [], []>} : vector<8x4xf32>, vector<4x128xf32>, vector<8x128xf32> -> vector<8x128xf32>
    %18 = arith.addf %13, %17 : vector<8x128xf32>
    %19 = vector.extract_strided_slice %4 {offsets = [0, 1], sizes = [4, 128], strides = [1, 1]} : vector<4x256xf32> to vector<4x128xf32>
    %c3 = arith.constant 3 : index
    %c0_10 = arith.constant 0 : index
    %c0_11 = arith.constant 0 : index
    %20 = vector.load %arg2[%c3, %c0_10, %c0_11] : memref<5x8x4xf32, #tpu.memory_space<vmem>>, vector<1x8x4xf32>
    %21 = vector.shape_cast %20 : vector<1x8x4xf32> to vector<8x4xf32>
    %cst_12 = arith.constant dense<0.000000e+00> : vector<8x128xf32>
    %22 = tpu.matmul %21, %19, %cst_12 {dimension_numbers = #tpu.dot_dimension_numbers<[1], [0], [0], [1], [0, 0, 1, 1], [], []>} : vector<8x4xf32>, vector<4x128xf32>, vector<8x128xf32> -> vector<8x128xf32>
    %23 = arith.addf %18, %22 : vector<8x128xf32>
    %24 = vector.extract_strided_slice %4 {offsets = [0, 0], sizes = [4, 128], strides = [1, 1]} : vector<4x256xf32> to vector<4x128xf32>
    %c4 = arith.constant 4 : index
    %c0_13 = arith.constant 0 : index
    %c0_14 = arith.constant 0 : index
    %25 = vector.load %arg2[%c4, %c0_13, %c0_14] : memref<5x8x4xf32, #tpu.memory_space<vmem>>, vector<1x8x4xf32>
    %26 = vector.shape_cast %25 : vector<1x8x4xf32> to vector<8x4xf32>
    %cst_15 = arith.constant dense<0.000000e+00> : vector<8x128xf32>
    %27 = tpu.matmul %26, %24, %cst_15 {dimension_numbers = #tpu.dot_dimension_numbers<[1], [0], [0], [1], [0, 0, 1, 1], [], []>} : vector<8x4xf32>, vector<4x128xf32>, vector<8x128xf32> -> vector<8x128xf32>
    %28 = arith.addf %23, %27 : vector<8x128xf32>
    %c0_16 = arith.constant 0 : index
    %c0_17 = arith.constant 0 : index
    %29 = vector.load %arg3[%c0_16, %c0_17] : memref<8x1xf32, #tpu.memory_space<vmem>>, vector<8x1xf32>
    %30 = vector.broadcast %29 : vector<8x1xf32> to vector<8x128xf32>
    %31 = arith.addf %28, %30 : vector<8x128xf32>
    %c0_18 = arith.constant 0 : index
    %c0_19 = arith.constant 0 : index
    %c0_20 = arith.constant 0 : index
    %32 = vector.load %arg5[%c0_18, %c0_19, %c0_20] : memref<1x8x128xf32, #tpu.memory_space<vmem>>, vector<1x8x128xf32>
    %33 = vector.shape_cast %32 : vector<1x8x128xf32> to vector<8x128xf32>
    %34 = vector.shape_cast %31 : vector<8x128xf32> to vector<1x8x128xf32>
    tpu.vector_store %arg5[%c0_18, %c0_19, %c0_20], %34 {strides = array<i32>} : memref<1x8x128xf32, #tpu.memory_space<vmem>>, vector<1x8x128xf32>,
    return
  }
  func.func @transform_0(%arg0: i32, %arg1: i32) -> (i32, i32, i32) {
    %c0_i32 = arith.constant 0 : i32
    %c0_i32_0 = arith.constant 0 : i32
    %c0_i32_1 = arith.constant 0 : i32
    %c0_i32_2 = arith.constant 0 : i32
    return %c0_i32, %c0_i32_0, %c0_i32_1 : i32, i32, i32
  }
  func.func @transform_1(%arg0: i32, %arg1: i32) -> (i32, i32) {
    %c0_i32 = arith.constant 0 : i32
    %c0_i32_0 = arith.constant 0 : i32
    %c0_i32_1 = arith.constant 0 : i32
    return %c0_i32, %c0_i32_0 : i32, i32
  }
  func.func @transform_2(%arg0: i32, %arg1: i32) -> (i32, i32, i32) {
    %c0_i32 = arith.constant 0 : i32
    %c0_i32_0 = arith.constant 0 : i32
    %c0_i32_1 = arith.constant 0 : i32
    return %arg0, %c0_i32, %c0_i32_0 : i32, i32, i32
  }
  func.func @transform_3(%arg0: i32, %arg1: i32) -> (i32, i32, i32) {
    %c0_i32 = arith.constant 0 : i32
    %c0_i32_0 = arith.constant 0 : i32
    return %arg0, %c0_i32, %arg1 : i32, i32, i32
  }
}

</mosaic_0001>

<llo_original>
// kernel: tpu_custom_call.1
$region0: #{tpu_custom_call.1}
  #allocation0 [shape = 'u32[]', space=smem, size = 0x4, offset = 0x4, fixed_abs, tag = 'smem constant byte address 0x4 - core index']
  #allocation1 [shape = 'u32[144,128]{1,0:T(1,128)}', space=vmem, size = 0x12000, scoped, tag = 'internal scratch']
  %s0 = inlined_call_operand.vmem [shape: f32[5,8,4], index: 0, kind: input, shape index: {}]
  %s1 = inlined_call_operand.vmem [shape: f32[8,1], index: 1, kind: input, shape index: {}]
  %s2 = inlined_call_operand.vmem [shape: f32[2,4,256], index: 2, kind: input, shape index: {}]
  %s3 = inlined_call_operand.hbm [shape: f32[2,8,128], index: 3, kind: output, shape index: {}]
  %s4 = sld [smem:[#allocation0]]
  $region45: #{tpu_custom_call.1} parent=0
    _
  %s6 = ssub.s32 1, %s4
  %s7 = scalar_select 0, %s6, %s4
  $region1: #{tpu_custom_call.1} parent=0
    #allocation2 [shape = 'u8[8192]{0}', space=vmem, size = 0x2000, scoped, tag = 'output window, operand 0']
    #allocation3 [shape = 's32[2]{0}', space=sflag, size = 0x8, scoped, tag = 'scoped memory for tpu_custom_call.1']
    %8 = vsyncpa [#allocation3], 0
    %s9 = scalar_lea.sflag [#allocation3], 1
    %10 = vsyncpa %s9, 0
    loop: start=0, step=1, limit=4
    $region2: #{tpu_custom_call.1} parent=1 // loop_pre_header
      _
    $region3: #{tpu_custom_call.1} parent=1 // loop_header
      %s12 = sphi 0, %s16
      %p13 = scmp.ge.s32.totalorder %s12, 4
      %s19 = sphi 0, %s31
      %s20 = sphi 0, %s27
      %s21 = sphi 0, %s19
      %s22 = sphi 0, %s20
      %s23 = sphi 0, %s21
      %s24 = sphi 0, %s22
      %s32 = sphi 0, %s32
      %s34 = sphi 0, %s32
      %s35 = sphi 0, %s34
      %s49 = sphi 0, %s35
      %s53 = sphi 0, %s53
      %s55 = sphi 0, %s53
      %s56 = sphi 0, %s55
      %s70 = sphi 0, %s56
      %s76 = sphi 0, %s78
      %s79 = sphi 0, %s76
      %s80 = sphi 0, %s79
      %s96 = sphi 0, %s80
      %s104 = sphi 0, %s106
      %s107 = sphi 0, %s104
      %s108 = sphi 0, %s107
      %s124 = sphi 0, %s108
    $region4: #{tpu_custom_call.1} parent=1 // loop_header_branch
      %15 = sbr.rel (%p13) target = $region8
    $region5: #{tpu_custom_call.1} parent=1 // loop_body
      %s17 = ssub.s32 %s12, 1
      %s18 = ssub.s32 %s12, 2
      %s25 = sadd.s32 1, %s20
      %p26 = scmp.ge.s32.totalorder %s25, 1
      %s27 = scalar_select %p26, 0, %s25
      %s28 = sadd.s32 1, %s19
      %s29 = scalar_select %p26, %s28, %s19
      %p30 = scmp.ge.s32.totalorder %s29, 2
      %s31 = scalar_select %p30, 0, %s29
      %s33 = sadd.s32 %s32, 1
      %p36 = scmp.eq.s32.totalorder %s12, 1
      %p37 = scmp.ne.s32.totalorder %s32, %s34
      %p38 = scmp.eq.s32.totalorder %s12, 0
      %p39 = por %p37, %p38
      %p40 = scmp.ne.s32.totalorder %s32, %s34
      %p41 = scmp.eq.s32.totalorder %s17, 1
      %p42 = por %p40, %p41
      %p43 = scmp.ne.s32.totalorder %s34, %s35
      %p44 = scmp.eq.s32.totalorder %s17, 0
      %p45 = por %p43, %p44
      %p46 = scmp.ne.s32.totalorder %s34, %s35
      %p47 = scmp.eq.s32.totalorder %s18, 1
      %p48 = por %p46, %p47
      %p50 = scmp.ne.s32.totalorder %s35, %s49
      %p51 = scmp.eq.s32.totalorder %s18, 0
      %p52 = por %p50, %p51
      %s54 = sadd.s32 %s53, 1
      %p57 = scmp.eq.s32.totalorder %s12, 1
      %p58 = scmp.ne.s32.totalorder %s53, %s55
      %p59 = scmp.eq.s32.totalorder %s12, 0
      %p60 = por %p58, %p59
      %p61 = scmp.ne.s32.totalorder %s53, %s55
      %p62 = scmp.eq.s32.totalorder %s17, 1
      %p63 = por %p61, %p62
      %p64 = scmp.ne.s32.totalorder %s55, %s56
      %p65 = scmp.eq.s32.totalorder %s17, 0
      %p66 = por %p64, %p65
      %p67 = scmp.ne.s32.totalorder %s55, %s56
      %p68 = scmp.eq.s32.totalorder %s18, 1
      %p69 = por %p67, %p68
      %p71 = scmp.ne.s32.totalorder %s56, %s70
      %p72 = scmp.eq.s32.totalorder %s18, 0
      %p73 = por %p71, %p72
      %s74 = ssub.s32 %s19, %s31
      %p75 = scmp.eq.s32.totalorder %s74, 0
      %s77 = sadd.s32 %s76, 1
      %s78 = scalar_select %p75, %s76, %s77
      %p81 = pneg %p75
      %p82 = scmp.eq.s32.totalorder %s12, 1
      %p83 = por %p81, %p82
      %p84 = scmp.ne.s32.totalorder %s76, %s79
      %p85 = scmp.eq.s32.totalorder %s12, 0
      %p86 = por %p84, %p85
      %p87 = scmp.ne.s32.totalorder %s76, %s79
      %p88 = scmp.eq.s32.totalorder %s17, 1
      %p89 = por %p87, %p88
      %p90 = scmp.ne.s32.totalorder %s79, %s80
      %p91 = scmp.eq.s32.totalorder %s17, 0
      %p92 = por %p90, %p91
      %p93 = scmp.ne.s32.totalorder %s79, %s80
      %p94 = scmp.eq.s32.totalorder %s18, 1
      %p95 = por %p93, %p94
      %p97 = scmp.ne.s32.totalorder %s80, %s96
      %p98 = scmp.eq.s32.totalorder %s18, 0
      %p99 = por %p97, %p98
      %s100 = ssub.s32 %s19, %s31
      %s101 = ssub.s32 %s20, %s27
      %s102 = sor.u32 %s100, %s101
      %p103 = scmp.eq.s32.totalorder %s102, 0
      %s105 = sadd.s32 %s104, 1
      %s106 = scalar_select %p103, %s104, %s105
      %p109 = pneg %p103
      %p110 = scmp.eq.s32.totalorder %s12, 1
      %p111 = por %p109, %p110
      %p112 = scmp.ne.s32.totalorder %s104, %s107
      %p113 = scmp.eq.s32.totalorder %s12, 0
      %p114 = por %p112, %p113
      %p115 = scmp.ne.s32.totalorder %s104, %s107
      %p116 = scmp.eq.s32.totalorder %s17, 1
      %p117 = por %p115, %p116
      %p118 = scmp.ne.s32.totalorder %s107, %s108
      %p119 = scmp.eq.s32.totalorder %s17, 0
      %p120 = por %p118, %p119
      %p121 = scmp.ne.s32.totalorder %s107, %s108
      %p122 = scmp.eq.s32.totalorder %s18, 1
      %p123 = por %p121, %p122
      %p125 = scmp.ne.s32.totalorder %s108, %s124
      %p126 = scmp.eq.s32.totalorder %s18, 0
      %p127 = por %p125, %p126
      %p128 = scmp.le.s32.totalorder 1, %s12
      %p129 = scmp.lt.s32.totalorder %s12, 3
      %p130 = pnand %p128, %p129
      %p131 = pneg %p130
      // Predicated region
      $region9: #{tpu_custom_call.1} parent=5 // pred_check
        _
      $region10: #{tpu_custom_call.1} parent=5 // pred_check_branch
        %133 = sbr.rel (%p130) target = $region12
      $region11: #{tpu_custom_call.1} parent=5 // pred_region
        %s134 = ssub.s32 %s12, 1
        // Predicated region
        $region13: #{tpu_custom_call.1} parent=11 // pred_check
          %p135 = pneg %p45
        $region14: #{tpu_custom_call.1} parent=11 // pred_check_branch
          %137 = sbr.rel (%p135) target = $region16
        $region15: #{tpu_custom_call.1} parent=11 // pred_region
          _
        $region16: #{tpu_custom_call.1} parent=11 // pred_fallthru
          _
        // Predicated region
        $region17: #{tpu_custom_call.1} parent=11 // pred_check
          %p138 = pneg %p66
        $region18: #{tpu_custom_call.1} parent=11 // pred_check_branch
          %140 = sbr.rel (%p138) target = $region20
        $region19: #{tpu_custom_call.1} parent=11 // pred_region
          _
        $region20: #{tpu_custom_call.1} parent=11 // pred_fallthru
          _
      $region12: #{tpu_custom_call.1} parent=5 // pred_fallthru
        _
      %p141 = scmp.lt.s32.totalorder %s12, 2
      // Predicated region
      $region21: #{tpu_custom_call.1} parent=5 // pred_check
        %p142 = pneg %p141
      $region22: #{tpu_custom_call.1} parent=5 // pred_check_branch
        %144 = sbr.rel (%p142) target = $region24
      $region23: #{tpu_custom_call.1} parent=5 // pred_region
        // Predicated region
        $region25: #{tpu_custom_call.1} parent=23 // pred_check
          %p145 = pneg %p86
        $region26: #{tpu_custom_call.1} parent=23 // pred_check_branch
          %147 = sbr.rel (%p145) target = $region28
        $region27: #{tpu_custom_call.1} parent=23 // pred_region
          %p148 = scmp.lt.s32.totalorder %s19, 1
          %s149 = scalar_select %p148, %s19, 1
          %s150 = smul.addr %s149, 2
          %s151 = smul.addr %s150, 4
          %s152 = scalar_lea.vmem %s2, %s151
        $region28: #{tpu_custom_call.1} parent=23 // pred_fallthru
          _
      $region24: #{tpu_custom_call.1} parent=5 // pred_fallthru
        _
      %p153 = scmp.le.s32.totalorder 1, %s12
      %p154 = scmp.lt.s32.totalorder %s12, 3
      %p155 = pnand %p153, %p154
      %p156 = pneg %p155
      // Predicated region
      $region29: #{tpu_custom_call.1} parent=5 // pred_check
        _
      $region30: #{tpu_custom_call.1} parent=5 // pred_check_branch
        %158 = sbr.rel (%p155) target = $region32
      $region31: #{tpu_custom_call.1} parent=5 // pred_region
        %s159 = ssub.s32 %s12, 1
        %p160 = pneg %p45
        %p161 = pneg %p42
        %p162 = pneg %p66
        %p163 = pneg %p63
        %p164 = scmp.lt.s32.totalorder %s21, 1
        %s165 = scalar_select %p164, %s21, 1
        %s166 = smul.addr %s165, 2
        %s167 = smul.addr %s166, 4
        %s168 = scalar_lea.vmem %s2, %s167
        %p169 = pneg %p92
        %p170 = pneg %p89
        %p171 = pneg %p120
        %p172 = pneg %p117
        %s173 = sand.u32 %s107, 1
        %s174 = scalar_lea.sflag [#allocation3], %s173
        %s175 = sand.u32 %s107, 1
        %s176 = smul.addr %s175, 8
        %s177 = scalar_lea.vmem [#allocation2], %s176
        %p178 = scmp.lt.s32.totalorder %s21, 1
        %s179 = scalar_select %p178, %s21, 1
        %s180 = smul.addr %s179, 2
        %s181 = smul.addr %s180, 4
        %s182 = scalar_lea.vmem %s2, %s181
        %s183 = smul.u32 %s22, 128
        %s184 = sshra.s32 %s183, 7
        %s185 = sand.u32 %s183, 127
        %s186 = smul.addr %s184, 4
        %s187 = scalar_lea.vmem %s182, %s186
        %v188 = vld [vmem:[%s187] sm:$0xff]
        %v189 = vld [vmem:[%s0] sm:$0xff]
        %s190 = scalar_lea.vmem %s0, 8
        %v191 = vld [vmem:[%s190] sm:$0xff]
        %v193 = vcombine.high %v188, %v188
        %194 = vrot.lane.b32.xlu0 %v188, 125
        %v195 = vpop.permute.xlu0 %194
        %196 = vrot.lane.b32.xlu0 %v193, 125
        %v197 = vpop.permute.xlu0 %196
        %vm198 = vcmask 1022976
        %v199 = vsel %vm198, %v195, %v197
        %vm200 = vcmask 31744
        %v202 = vsel %vm200, %v191, 0
        %vm204 = vcmask 1043456
        %v205 = vsel %vm204, %v199, 0
        %207 = vmatprep.subr.mxu0 0.0
        %208 = vmatpush1.msra.mxu0 %v205
        %209 = vmatprep.subr.mxu0 0.0
        %210 = vmatpush1.msra.mxu0 0.0
        %211 = vmatprep.subr.mxu0 0.0
        %212 = vmatpush1.msra.mxu0 0.0
        %213 = vmatprep.subr.mxu0 0.0
        %214 = vmatpush1.msra.mxu0 0.0
        %215 = vmatprep.subr.mxu0 0.0
        %216 = vmatpush1.msra.mxu0 0.0
        %217 = vmatprep.subr.mxu0 0.0
        %218 = vmatpush1.msra.mxu0 0.0
        %219 = vmatprep.subr.mxu0 0.0
        %220 = vmatpush1.msra.mxu0 0.0
        %221 = vmatprep.subr.mxu0 0.0
        %222 = vmatpush1.msra.mxu0 0.0
        %223 = vmatprep.subr.mxu0 0.0
        %224 = vmatpush1.msra.mxu0 0.0
        %225 = vmatprep.subr.mxu0 0.0
        %226 = vmatpush1.msra.mxu0 0.0
        %227 = vmatprep.subr.mxu0 0.0
        %228 = vmatpush1.msra.mxu0 0.0
        %229 = vmatprep.subr.mxu0 0.0
        %230 = vmatpush1.msra.mxu0 0.0
        %231 = vmatprep.subr.mxu0 0.0
        %232 = vmatpush1.msra.mxu0 0.0
        %233 = vmatprep.subr.mxu0 0.0
        %234 = vmatpush1.msra.mxu0 0.0
        %235 = vmatprep.subr.mxu0 0.0
        %236 = vmatpush1.msra.mxu0 0.0
        %237 = vmatprep.subr.mxu0 0.0
        %238 = vmatpush1.msra.mxu0 0.0
        %239 = vmatprep.subr.mxu0 0.0
        %240 = vmatpush1.msra.mxu0 0.0
        %241 = vmatprep.subr.mxu0 0.0
        %242 = vmatpush1.msra.mxu0 0.0
        %243 = vmatprep.subr.mxu0 0.0
        %244 = vmatpush1.msra.mxu0 0.0
        %245 = vmatprep.subr.mxu0 0.0
        %246 = vmatpush1.msra.mxu0 0.0
        %247 = vmatprep.subr.mxu0 0.0
        %248 = vmatpush1.msra.mxu0 0.0
        %249 = vmatprep.subr.mxu0 0.0
        %250 = vmatpush1.msra.mxu0 0.0
        %251 = vmatprep.subr.mxu0 0.0
        %252 = vmatpush1.msra.mxu0 0.0
        %253 = vmatprep.subr.mxu0 0.0
        %254 = vmatpush1.msra.mxu0 0.0
        %255 = vmatprep.subr.mxu0 0.0
        %256 = vmatpush1.msra.mxu0 0.0
        %257 = vmatprep.subr.mxu0 0.0
        %258 = vmatpush1.msra.mxu0 0.0
        %259 = vmatprep.subr.mxu0 0.0
        %260 = vmatpush1.msra.mxu0 0.0
        %261 = vmatprep.subr.mxu0 0.0
        %262 = vmatpush1.msra.mxu0 0.0
        %263 = vmatprep.subr.mxu0 0.0
        %264 = vmatpush1.msra.mxu0 0.0
        %265 = vmatprep.subr.mxu0 0.0
        %266 = vmatpush1.msra.mxu0 0.0
        %267 = vmatprep.subr.mxu0 0.0
        %268 = vmatpush1.msra.mxu0 0.0
        %269 = vmatprep.subr.mxu0 0.0
        %270 = vmatpush1.msra.mxu0 0.0
        %271 = vmatprep.mubr.f32.mxu0 0.0
        %272 = vmatmul.mubr.f32.gmra.mrb[0].mxu0 %v202
        %v273 = vpop.f32.mrb[0].mxu0
        %v274 = vadd.f32 0.0, %v273
        %v275 = vpop.f32.mrb[0].mxu0
        %276 = vdwg.mxu0
        %277 = vrot.lane.b32.xlu0 %v188, 124
        %v278 = vpop.permute.xlu0 %277
        %279 = vrot.lane.b32.xlu0 %v193, 124
        %v280 = vpop.permute.xlu0 %279
        %vm281 = vcmask 1014784
        %v282 = vsel %vm281, %v278, %v280
        %v284 = vsel %vm200, %v189, 0
        %v286 = vsel %vm204, %v282, 0
        %288 = vmatprep.subr.mxu0 0.0
        %289 = vmatpush1.msra.mxu0 %v286
        %290 = vmatprep.subr.mxu0 0.0
        %291 = vmatpush1.msra.mxu0 0.0
        %292 = vmatprep.subr.mxu0 0.0
        %293 = vmatpush1.msra.mxu0 0.0
        %294 = vmatprep.subr.mxu0 0.0
        %295 = vmatpush1.msra.mxu0 0.0
        %296 = vmatprep.subr.mxu0 0.0
        %297 = vmatpush1.msra.mxu0 0.0
        %298 = vmatprep.subr.mxu0 0.0
        %299 = vmatpush1.msra.mxu0 0.0
        %300 = vmatprep.subr.mxu0 0.0
        %301 = vmatpush1.msra.mxu0 0.0
        %302 = vmatprep.subr.mxu0 0.0
        %303 = vmatpush1.msra.mxu0 0.0
        %304 = vmatprep.subr.mxu0 0.0
        %305 = vmatpush1.msra.mxu0 0.0
        %306 = vmatprep.subr.mxu0 0.0
        %307 = vmatpush1.msra.mxu0 0.0
        %308 = vmatprep.subr.mxu0 0.0
        %309 = vmatpush1.msra.mxu0 0.0
        %310 = vmatprep.subr.mxu0 0.0
        %311 = vmatpush1.msra.mxu0 0.0
        %312 = vmatprep.subr.mxu0 0.0
        %313 = vmatpush1.msra.mxu0 0.0
        %314 = vmatprep.subr.mxu0 0.0
        %315 = vmatpush1.msra.mxu0 0.0
        %316 = vmatprep.subr.mxu0 0.0
        %317 = vmatpush1.msra.mxu0 0.0
        %318 = vmatprep.subr.mxu0 0.0
        %319 = vmatpush1.msra.mxu0 0.0
        %320 = vmatprep.subr.mxu0 0.0
        %321 = vmatpush1.msra.mxu0 0.0
        %322 = vmatprep.subr.mxu0 0.0
        %323 = vmatpush1.msra.mxu0 0.0
        %324 = vmatprep.subr.mxu0 0.0
        %325 = vmatpush1.msra.mxu0 0.0
        %326 = vmatprep.subr.mxu0 0.0
        %327 = vmatpush1.msra.mxu0 0.0
        %328 = vmatprep.subr.mxu0 0.0
        %329 = vmatpush1.msra.mxu0 0.0
        %330 = vmatprep.subr.mxu0 0.0
        %331 = vmatpush1.msra.mxu0 0.0
        %332 = vmatprep.subr.mxu0 0.0
        %333 = vmatpush1.msra.mxu0 0.0
        %334 = vmatprep.subr.mxu0 0.0
        %335 = vmatpush1.msra.mxu0 0.0
        %336 = vmatprep.subr.mxu0 0.0
        %337 = vmatpush1.msra.mxu0 0.0
        %338 = vmatprep.subr.mxu0 0.0
        %339 = vmatpush1.msra.mxu0 0.0
        %340 = vmatprep.subr.mxu0 0.0
        %341 = vmatpush1.msra.mxu0 0.0
        %342 = vmatprep.subr.mxu0 0.0
        %343 = vmatpush1.msra.mxu0 0.0
        %344 = vmatprep.subr.mxu0 0.0
        %345 = vmatpush1.msra.mxu0 0.0
        %346 = vmatprep.subr.mxu0 0.0
        %347 = vmatpush1.msra.mxu0 0.0
        %348 = vmatprep.subr.mxu0 0.0
        %349 = vmatpush1.msra.mxu0 0.0
        %350 = vmatprep.subr.mxu0 0.0
        %351 = vmatpush1.msra.mxu0 0.0
        %352 = vmatprep.mubr.f32.mxu0 0.0
        %353 = vmatmul.mubr.f32.gmra.mrb[0].mxu0 %v284
        %v354 = vpop.f32.mrb[0].mxu0
        %v355 = vadd.f32 %v274, %v354
        %v356 = vpop.f32.mrb[0].mxu0
        %357 = vdwg.mxu0
        %s358 = scalar_lea.vmem %s0, 16
        %v359 = vld [vmem:[%s358] sm:$0xff]
        %360 = vrot.lane.b32.xlu0 %v188, 126
        %v361 = vpop.permute.xlu0 %360
        %362 = vrot.lane.b32.xlu0 %v193, 126
        %v363 = vpop.permute.xlu0 %362
        %vm364 = vcmask 1031168
        %v365 = vsel %vm364, %v361, %v363
        %v367 = vsel %vm200, %v359, 0
        %v369 = vsel %vm204, %v365, 0
        %371 = vmatprep.subr.mxu0 0.0
        %372 = vmatpush1.msra.mxu0 %v369
        %373 = vmatprep.subr.mxu0 0.0
        %374 = vmatpush1.msra.mxu0 0.0
        %375 = vmatprep.subr.mxu0 0.0
        %376 = vmatpush1.msra.mxu0 0.0
        %377 = vmatprep.subr.mxu0 0.0
        %378 = vmatpush1.msra.mxu0 0.0
        %379 = vmatprep.subr.mxu0 0.0
        %380 = vmatpush1.msra.mxu0 0.0
        %381 = vmatprep.subr.mxu0 0.0
        %382 = vmatpush1.msra.mxu0 0.0
        %383 = vmatprep.subr.mxu0 0.0
        %384 = vmatpush1.msra.mxu0 0.0
        %385 = vmatprep.subr.mxu0 0.0
        %386 = vmatpush1.msra.mxu0 0.0
        %387 = vmatprep.subr.mxu0 0.0
        %388 = vmatpush1.msra.mxu0 0.0
        %389 = vmatprep.subr.mxu0 0.0
        %390 = vmatpush1.msra.mxu0 0.0
        %391 = vmatprep.subr.mxu0 0.0
        %392 = vmatpush1.msra.mxu0 0.0
        %393 = vmatprep.subr.mxu0 0.0
        %394 = vmatpush1.msra.mxu0 0.0
        %395 = vmatprep.subr.mxu0 0.0
        %396 = vmatpush1.msra.mxu0 0.0
        %397 = vmatprep.subr.mxu0 0.0
        %398 = vmatpush1.msra.mxu0 0.0
        %399 = vmatprep.subr.mxu0 0.0
        %400 = vmatpush1.msra.mxu0 0.0
        %401 = vmatprep.subr.mxu0 0.0
        %402 = vmatpush1.msra.mxu0 0.0
        %403 = vmatprep.subr.mxu0 0.0
        %404 = vmatpush1.msra.mxu0 0.0
        %405 = vmatprep.subr.mxu0 0.0
        %406 = vmatpush1.msra.mxu0 0.0
        %407 = vmatprep.subr.mxu0 0.0
        %408 = vmatpush1.msra.mxu0 0.0
        %409 = vmatprep.subr.mxu0 0.0
        %410 = vmatpush1.msra.mxu0 0.0
        %411 = vmatprep.subr.mxu0 0.0
        %412 = vmatpush1.msra.mxu0 0.0
        %413 = vmatprep.subr.mxu0 0.0
        %414 = vmatpush1.msra.mxu0 0.0
        %415 = vmatprep.subr.mxu0 0.0
        %416 = vmatpush1.msra.mxu0 0.0
        %417 = vmatprep.subr.mxu0 0.0
        %418 = vmatpush1.msra.mxu0 0.0
        %419 = vmatprep.subr.mxu0 0.0
        %420 = vmatpush1.msra.mxu0 0.0
        %421 = vmatprep.subr.mxu0 0.0
        %422 = vmatpush1.msra.mxu0 0.0
        %423 = vmatprep.subr.mxu0 0.0
        %424 = vmatpush1.msra.mxu0 0.0
        %425 = vmatprep.subr.mxu0 0.0
        %426 = vmatpush1.msra.mxu0 0.0
        %427 = vmatprep.subr.mxu0 0.0
        %428 = vmatpush1.msra.mxu0 0.0
        %429 = vmatprep.subr.mxu0 0.0
        %430 = vmatpush1.msra.mxu0 0.0
        %431 = vmatprep.subr.mxu0 0.0
        %432 = vmatpush1.msra.mxu0 0.0
        %433 = vmatprep.subr.mxu0 0.0
        %434 = vmatpush1.msra.mxu0 0.0
        %435 = vmatprep.mubr.f32.mxu0 0.0
        %436 = vmatmul.mubr.f32.gmra.mrb[0].mxu0 %v367
        %v437 = vpop.f32.mrb[0].mxu0
        %v438 = vadd.f32 0.0, %v437
        %v439 = vpop.f32.mrb[0].mxu0
        %440 = vdwg.mxu0
        %v441 = vadd.f32 %v355, %v438
        %s442 = scalar_lea.vmem %s0, 24
        %v443 = vld [vmem:[%s442] sm:$0xff]
        %444 = vrot.lane.b32.xlu0 %v188, 127
        %v445 = vpop.permute.xlu0 %444
        %446 = vrot.lane.b32.xlu0 %v193, 127
        %v447 = vpop.permute.xlu0 %446
        %vm448 = vcmask 1039360
        %v449 = vsel %vm448, %v445, %v447
        %v451 = vsel %vm200, %v443, 0
        %v453 = vsel %vm204, %v449, 0
        %455 = vmatprep.subr.mxu0 0.0
        %456 = vmatpush1.msra.mxu0 %v453
        %457 = vmatprep.subr.mxu0 0.0
        %458 = vmatpush1.msra.mxu0 0.0
        %459 = vmatprep.subr.mxu0 0.0
        %460 = vmatpush1.msra.mxu0 0.0
        %461 = vmatprep.subr.mxu0 0.0
        %462 = vmatpush1.msra.mxu0 0.0
        %463 = vmatprep.subr.mxu0 0.0
        %464 = vmatpush1.msra.mxu0 0.0
        %465 = vmatprep.subr.mxu0 0.0
        %466 = vmatpush1.msra.mxu0 0.0
        %467 = vmatprep.subr.mxu0 0.0
        %468 = vmatpush1.msra.mxu0 0.0
        %469 = vmatprep.subr.mxu0 0.0
        %470 = vmatpush1.msra.mxu0 0.0
        %471 = vmatprep.subr.mxu0 0.0
        %472 = vmatpush1.msra.mxu0 0.0
        %473 = vmatprep.subr.mxu0 0.0
        %474 = vmatpush1.msra.mxu0 0.0
        %475 = vmatprep.subr.mxu0 0.0
        %476 = vmatpush1.msra.mxu0 0.0
        %477 = vmatprep.subr.mxu0 0.0
        %478 = vmatpush1.msra.mxu0 0.0
        %479 = vmatprep.subr.mxu0 0.0
        %480 = vmatpush1.msra.mxu0 0.0
        %481 = vmatprep.subr.mxu0 0.0
        %482 = vmatpush1.msra.mxu0 0.0
        %483 = vmatprep.subr.mxu0 0.0
        %484 = vmatpush1.msra.mxu0 0.0
        %485 = vmatprep.subr.mxu0 0.0
        %486 = vmatpush1.msra.mxu0 0.0
        %487 = vmatprep.subr.mxu0 0.0
        %488 = vmatpush1.msra.mxu0 0.0
        %489 = vmatprep.subr.mxu0 0.0
        %490 = vmatpush1.msra.mxu0 0.0
        %491 = vmatprep.subr.mxu0 0.0
        %492 = vmatpush1.msra.mxu0 0.0
        %493 = vmatprep.subr.mxu0 0.0
        %494 = vmatpush1.msra.mxu0 0.0
        %495 = vmatprep.subr.mxu0 0.0
        %496 = vmatpush1.msra.mxu0 0.0
        %497 = vmatprep.subr.mxu0 0.0
        %498 = vmatpush1.msra.mxu0 0.0
        %499 = vmatprep.subr.mxu0 0.0
        %500 = vmatpush1.msra.mxu0 0.0
        %501 = vmatprep.subr.mxu0 0.0
        %502 = vmatpush1.msra.mxu0 0.0
        %503 = vmatprep.subr.mxu0 0.0
        %504 = vmatpush1.msra.mxu0 0.0
        %505 = vmatprep.subr.mxu0 0.0
        %506 = vmatpush1.msra.mxu0 0.0
        %507 = vmatprep.subr.mxu0 0.0
        %508 = vmatpush1.msra.mxu0 0.0
        %509 = vmatprep.subr.mxu0 0.0
        %510 = vmatpush1.msra.mxu0 0.0
        %511 = vmatprep.subr.mxu0 0.0
        %512 = vmatpush1.msra.mxu0 0.0
        %513 = vmatprep.subr.mxu0 0.0
        %514 = vmatpush1.msra.mxu0 0.0
        %515 = vmatprep.subr.mxu0 0.0
        %516 = vmatpush1.msra.mxu0 0.0
        %517 = vmatprep.subr.mxu0 0.0
        %518 = vmatpush1.msra.mxu0 0.0
        %519 = vmatprep.mubr.f32.mxu0 0.0
        %520 = vmatmul.mubr.f32.gmra.mrb[0].mxu0 %v451
        %v521 = vpop.f32.mrb[0].mxu0
        %v522 = vadd.f32 0.0, %v521
        %v523 = vpop.f32.mrb[0].mxu0
        %524 = vdwg.mxu0
        %v525 = vadd.f32 %v441, %v522
        %s526 = scalar_lea.vmem %s0, 32
        %v527 = vld [vmem:[%s526] sm:$0xff]
        %v529 = vsel %vm200, %v527, 0
        %v531 = vsel %vm204, %v188, 0
        %533 = vmatprep.subr.mxu0 0.0
        %534 = vmatpush1.msra.mxu0 %v531
        %535 = vmatprep.subr.mxu0 0.0
        %536 = vmatpush1.msra.mxu0 0.0
        %537 = vmatprep.subr.mxu0 0.0
        %538 = vmatpush1.msra.mxu0 0.0
        %539 = vmatprep.subr.mxu0 0.0
        %540 = vmatpush1.msra.mxu0 0.0
        %541 = vmatprep.subr.mxu0 0.0
        %542 = vmatpush1.msra.mxu0 0.0
        %543 = vmatprep.subr.mxu0 0.0
        %544 = vmatpush1.msra.mxu0 0.0
        %545 = vmatprep.subr.mxu0 0.0
        %546 = vmatpush1.msra.mxu0 0.0
        %547 = vmatprep.subr.mxu0 0.0
        %548 = vmatpush1.msra.mxu0 0.0
        %549 = vmatprep.subr.mxu0 0.0
        %550 = vmatpush1.msra.mxu0 0.0
        %551 = vmatprep.subr.mxu0 0.0
        %552 = vmatpush1.msra.mxu0 0.0
        %553 = vmatprep.subr.mxu0 0.0
        %554 = vmatpush1.msra.mxu0 0.0
        %555 = vmatprep.subr.mxu0 0.0
        %556 = vmatpush1.msra.mxu0 0.0
        %557 = vmatprep.subr.mxu0 0.0
        %558 = vmatpush1.msra.mxu0 0.0
        %559 = vmatprep.subr.mxu0 0.0
        %560 = vmatpush1.msra.mxu0 0.0
        %561 = vmatprep.subr.mxu0 0.0
        %562 = vmatpush1.msra.mxu0 0.0
        %563 = vmatprep.subr.mxu0 0.0
        %564 = vmatpush1.msra.mxu0 0.0
        %565 = vmatprep.subr.mxu0 0.0
        %566 = vmatpush1.msra.mxu0 0.0
        %567 = vmatprep.subr.mxu0 0.0
        %568 = vmatpush1.msra.mxu0 0.0
        %569 = vmatprep.subr.mxu0 0.0
        %570 = vmatpush1.msra.mxu0 0.0
        %571 = vmatprep.subr.mxu0 0.0
        %572 = vmatpush1.msra.mxu0 0.0
        %573 = vmatprep.subr.mxu0 0.0
        %574 = vmatpush1.msra.mxu0 0.0
        %575 = vmatprep.subr.mxu0 0.0
        %576 = vmatpush1.msra.mxu0 0.0
        %577 = vmatprep.subr.mxu0 0.0
        %578 = vmatpush1.msra.mxu0 0.0
        %579 = vmatprep.subr.mxu0 0.0
        %580 = vmatpush1.msra.mxu0 0.0
        %581 = vmatprep.subr.mxu0 0.0
        %582 = vmatpush1.msra.mxu0 0.0
        %583 = vmatprep.subr.mxu0 0.0
        %584 = vmatpush1.msra.mxu0 0.0
        %585 = vmatprep.subr.mxu0 0.0
        %586 = vmatpush1.msra.mxu0 0.0
        %587 = vmatprep.subr.mxu0 0.0
        %588 = vmatpush1.msra.mxu0 0.0
        %589 = vmatprep.subr.mxu0 0.0
        %590 = vmatpush1.msra.mxu0 0.0
        %591 = vmatprep.subr.mxu0 0.0
        %592 = vmatpush1.msra.mxu0 0.0
        %593 = vmatprep.subr.mxu0 0.0
        %594 = vmatpush1.msra.mxu0 0.0
        %595 = vmatprep.subr.mxu0 0.0
        %596 = vmatpush1.msra.mxu0 0.0
        %597 = vmatprep.mubr.f32.mxu0 0.0
        %598 = vmatmul.mubr.f32.gmra.mrb[0].mxu0 %v529
        %v599 = vpop.f32.mrb[0].mxu0
        %v600 = vadd.f32 0.0, %v599
        %v601 = vpop.f32.mrb[0].mxu0
        %602 = vdwg.mxu0
        %v603 = vadd.f32 %v525, %v600
        %v604 = vld [vmem:[%s1] sm:$0xff]
        %606 = vset.pattern.permute.xlu0 0
        %607 = vperm.xlu0 %606, %v604
        %v608 = vpop.permute.xlu0 %607
        %v610 = vadd.f32 %v603, %v608
        %611 = vst [vmem:[%s177] sm:$0xff] %v610
        %s612 = sand.u32 %s107, 1
        %s613 = scalar_lea.sflag [#allocation3], %s612
        %s614 = sand.u32 %s107, 1
        %s615 = smul.addr %s614, 8
        %s616 = scalar_lea.vmem [#allocation2], %s615
        // Predicated region
        $region33: #{tpu_custom_call.1} parent=31 // pred_check
          %p617 = pneg %p117
        $region34: #{tpu_custom_call.1} parent=31 // pred_check_branch
          %619 = sbr.rel (%p617) target = $region36
        $region35: #{tpu_custom_call.1} parent=31 // pred_region
          %s621 = ssub.s32 128, 128
          %622 = vsyncadd %s613, %s621
          %s623 = sadd.s32 %s22, %s21
          %s624 = smul.addr %s623, 128
          %s625 = scalar_lea.hbm %s3, %s624
          %s627 = sshll.u32 %s616, 4
          %s628 = int_to_ptr.vmem [resolvable:$true] %s627
          %630 = dma.vmem_to_hbm [thread:$0]  %s628, 128, %s625, %s613
        $region36: #{tpu_custom_call.1} parent=31 // pred_fallthru
          _
      $region32: #{tpu_custom_call.1} parent=5 // pred_fallthru
        _
      %p631 = scmp.le.s32.totalorder 2, %s12
      // Predicated region
      $region37: #{tpu_custom_call.1} parent=5 // pred_check
        %p632 = pneg %p631
      $region38: #{tpu_custom_call.1} parent=5 // pred_check_branch
        %634 = sbr.rel (%p632) target = $region40
      $region39: #{tpu_custom_call.1} parent=5 // pred_region
        %s635 = ssub.s32 %s12, 2
        // Predicated region
        $region41: #{tpu_custom_call.1} parent=39 // pred_check
          %p636 = pneg %p123
        $region42: #{tpu_custom_call.1} parent=39 // pred_check_branch
          %638 = sbr.rel (%p636) target = $region44
        $region43: #{tpu_custom_call.1} parent=39 // pred_region
          %s639 = sand.u32 %s108, 1
          %s640 = scalar_lea.sflag [#allocation3], %s639
          %s641 = sand.u32 %s108, 1
          %s642 = smul.addr %s641, 8
          %s643 = scalar_lea.vmem [#allocation2], %s642
          %644 = dma.done %s640, 128
        $region44: #{tpu_custom_call.1} parent=39 // pred_fallthru
          _
      $region40: #{tpu_custom_call.1} parent=5 // pred_fallthru
        _
    $region6: #{tpu_custom_call.1} parent=1 // loop_footer
      %s16 = sadd.s32 1, %s12
    $region7: #{tpu_custom_call.1} parent=1 // loop_footer_branch
      %11 = sbr.rel target = $region3
    $region8: #{tpu_custom_call.1} parent=1 // loop_exit
      _
    %645 = vsyncpa [#allocation3], 1
    %s646 = scalar_lea.sflag [#allocation3], 1
    %647 = vsyncpa %s646, 1

</llo_original>
